<compile_context>
chip_gen: v7x
topology: tpu7x:2x2x1
jax: 0.10.0
libtpu: 0.0.40
codegen_flags: <defaults>
</compile_context>

<pallas_src>
import jax
import jax.numpy as jnp
import numpy as np
from jax.experimental import pallas as pl
from jax.experimental.pallas import tpu as pltpu

EPS = 1e-5                      # torch.nn.LayerNorm default
_INV_SQRT2 = 0.7071067811865475


def _layernorm(x, gamma, beta):
    mu = jnp.mean(x, axis=-1, keepdims=True)
    xc = x - mu
    var = jnp.mean(xc * xc, axis=-1, keepdims=True)
    return xc * jax.lax.rsqrt(var + EPS) * gamma + beta


def encoder_block_kernel(x_full_ref, x_tile_ref,
                         wv_ref, wo_ref, bo_ref,
                         g1_ref, be1_ref, g2_ref, be2_ref,
                         w1_ref, b1_ref, w2_ref, b2_ref,
                         o_ref):
    # ---------------- "attention" branch (mathematically reduced) -----------
    # out of the literal einsum == token-sum of V, independent of the query.
    xf = x_full_ref[...]                                           # (N, D) f32
    ln1 = _layernorm(xf, g1_ref[...], be1_ref[...])
    ln1_sum = jnp.sum(ln1, axis=0, keepdims=True)                  # (1, D)
    v_sum = jnp.dot(ln1_sum.astype(wv_ref.dtype), wv_ref[...],
                    preferred_element_type=jnp.float32)            # (1, D)
    attn_out = jnp.dot(v_sum.astype(wo_ref.dtype), wo_ref[...],
                       preferred_element_type=jnp.float32) + bo_ref[...]

    # ---------------- residual + MLP on this token tile ---------------------
    xt = x_tile_ref[...]                                           # (TN, D) f32
    x1 = xt + attn_out                                             # broadcast over tokens

    ln2 = _layernorm(x1, g2_ref[...], be2_ref[...])
    h1 = jnp.dot(ln2.astype(w1_ref.dtype), w1_ref[...],
                 preferred_element_type=jnp.float32) + b1_ref[...]
    g = 0.5 * h1 * (1.0 + jax.lax.erf(h1 * _INV_SQRT2))            # exact GELU, f32/EUP
    h2 = jnp.dot(g.astype(w2_ref.dtype), w2_ref[...],
                 preferred_element_type=jnp.float32) + b2_ref[...]

    o_ref[...] = (x1 + h2).astype(o_ref.dtype)


def _pick_token_tile(n_tokens):
    # 256-wide tiles feed the v6e/v7x 256x256 MXU; 128 matches v5e; otherwise
    # fall back to the whole (padded-by-hardware) sequence.
    for t in (256, 128):
        if n_tokens % t == 0:
            return t
    return n_tokens


def encoder_block(x, params, heads, *, compute_dtype=jnp.bfloat16):
    B, N, D = x.shape
    assert D % heads == 0
    hidden = params["w1"].shape[1]
    TN = _pick_token_tile(N)
    n_tiles = N // TN

    # Only the V columns of W_qkv are ever used (see kernel comment) -> slice
    # them out here so only D*D (not D*3D) bytes are DMA'd.  Matmul weights go
    # bf16 for the MXU; LN params and biases stay f32 for the VPU adds.
    wv = params["wqkv"][:, 2 * D:3 * D].astype(compute_dtype)
    wo = params["wo"].astype(compute_dtype)
    w1 = params["w1"].astype(compute_dtype)
    w2 = params["w2"].astype(compute_dtype)

    def const2d(shape):                 # weight/bias resident across the grid
        return pl.BlockSpec(shape, lambda b, t: (0, 0))

    return pl.pallas_call(
        encoder_block_kernel,
        out_shape=jax.ShapeDtypeStruct((B, N, D), x.dtype),
        grid=(B, n_tiles),
        in_specs=[
            pl.BlockSpec((pl.Squeezed(), N, D), lambda b, t: (b, 0, 0)),   # x, full sequence
            pl.BlockSpec((pl.Squeezed(), TN, D), lambda b, t: (b, t, 0)),  # x, token tile
            const2d((D, D)),            # Wv  (V columns of W_qkv; qkv_bias=False)
            const2d((D, D)),            # W_out
            const2d((1, D)),            # b_out
            const2d((1, D)),            # ln1 gamma
            const2d((1, D)),            # ln1 beta
            const2d((1, D)),            # ln2 gamma
            const2d((1, D)),            # ln2 beta
            const2d((D, hidden)),       # fc1 weight
            const2d((1, hidden)),       # fc1 bias
            const2d((hidden, D)),       # fc2 weight
            const2d((1, D)),            # fc2 bias
        ],
        out_specs=pl.BlockSpec((pl.Squeezed(), TN, D), lambda b, t: (b, t, 0)),
        compiler_params=pltpu.CompilerParams(
            dimension_semantics=("parallel", "parallel"),
            vmem_limit_bytes=48 * 1024 * 1024,
        ),
    )(x, x, wv, wo, params["bo"],
      params["g1"], params["be1"], params["g2"], params["be2"],
      w1, params["b1"], w2, params["b2"])


def reference(x, p, heads):
    """Pure-JAX reference mirroring the PyTorch forward literally (f32)."""
    B, N, D = x.shape
    hd = D // heads

    def ln(v, g, b):
        mu = v.mean(-1, keepdims=True)
        var = ((v - mu) ** 2).mean(-1, keepdims=True)
        return (v - mu) / jnp.sqrt(var + EPS) * g + b

    ln1 = ln(x, p["g1"], p["be1"])
    qkv = ln1 @ p["wqkv"]                                   # (B, N, 3D)
    qkv = qkv.reshape(B, N, 3, heads, hd).transpose(2, 0, 3, 1, 4)
    q, k, v = qkv[0], qkv[1], qkv[2]                        # (B, H, N, hd)
    scale = hd ** (-0.5)
    qk = jnp.einsum("bhqd,bhkd->bhqk", q, k)
    attn = jax.nn.softmax(qk / scale ** 0.5, axis=3)
    wa = jnp.einsum("bhqk,bhvd->bqhd", attn, v).reshape(B, N, D)
    x1 = x + wa @ p["wo"] + p["bo"]
    ln2 = ln(x1, p["g2"], p["be2"])
    h1 = ln2 @ p["w1"] + p["b1"]
    g = 0.5 * h1 * (1.0 + jax.scipy.special.erf(h1 / jnp.sqrt(2.0)))
    return x1 + (g @ p["w2"] + p["b2"])


if __name__ == "__main__":
    # NOTE: these toy shapes (N=8, D=32 < 128 lanes) are for correctness only;
    # benchmark at real ViT sizes (N>=256, D>=768) for meaningful numbers.
    B, N, D = 2, 8, 32            # batch, n_patches+1, embed_dim
    heads = 4
    mlp_ratio = 4.0
    hidden = int(D * mlp_ratio)

    key = jax.random.PRNGKey(0)
    keys = jax.random.split(key, 12)
    f32 = jnp.float32

    params = {
        "wqkv": 0.05 * jax.random.normal(keys[0], (D, 3 * D), f32),
        "wo":   0.05 * jax.random.normal(keys[1], (D, D), f32),
        "bo":   0.05 * jax.random.normal(keys[2], (1, D), f32),
        "g1":   1.0 + 0.05 * jax.random.normal(keys[3], (1, D), f32),
        "be1":  0.05 * jax.random.normal(keys[4], (1, D), f32),
        "g2":   1.0 + 0.05 * jax.random.normal(keys[5], (1, D), f32),
        "be2":  0.05 * jax.random.normal(keys[6], (1, D), f32),
        "w1":   0.05 * jax.random.normal(keys[7], (D, hidden), f32),
        "b1":   0.05 * jax.random.normal(keys[8], (1, hidden), f32),
        "w2":   0.05 * jax.random.normal(keys[9], (hidden, D), f32),
        "b2":   0.05 * jax.random.normal(keys[10], (1, D), f32),
    }
    x = jax.random.normal(keys[11], (B, N, D), f32)

    out = jax.block_until_ready(encoder_block(x, params, heads))
    ref = jax.block_until_ready(reference(x, params, heads))

    # Kernel runs matmul operands in bf16 (f32 accumulation); everything else f32.
    np.testing.assert_allclose(np.asarray(out), np.asarray(ref), atol=5e-3, rtol=5e-3)

    print("KERNEL_OK")
</pallas_src>

<mosaic_0001>
module attributes {stable_mosaic.version = 11 : i64} {
  func.func @encoder_block_kernel(%arg0: i32, %arg1: i32, %arg2: memref<1x8x32xf32, #tpu.memory_space<vmem>>, %arg3: memref<1x8x32xf32, #tpu.memory_space<vmem>>, %arg4: memref<32x32xbf16, #tpu.memory_space<vmem>>, %arg5: memref<32x32xbf16, #tpu.memory_space<vmem>>, %arg6: memref<1x32xf32, #tpu.memory_space<vmem>>, %arg7: memref<1x32xf32, #tpu.memory_space<vmem>>, %arg8: memref<1x32xf32, #tpu.memory_space<vmem>>, %arg9: memref<1x32xf32, #tpu.memory_space<vmem>>, %arg10: memref<1x32xf32, #tpu.memory_space<vmem>>, %arg11: memref<32x128xbf16, #tpu.memory_space<vmem>>, %arg12: memref<1x128xf32, #tpu.memory_space<vmem>>, %arg13: memref<128x32xbf16, #tpu.memory_space<vmem>>, %arg14: memref<1x32xf32, #tpu.memory_space<vmem>>, %arg15: memref<1x8x32xf32, #tpu.memory_space<vmem>>) attributes {dimension_semantics = [#tpu.dimension_semantics<parallel>, #tpu.dimension_semantics<parallel>], iteration_bounds = array<i64: 2, 1>, scalar_prefetch = 0 : i64, scratch_operands = 0 : i64, tpu.core_type = #tpu.core_type<tc>, window_params = [{transform_indices = @transform_0, window_bounds = array<i64: 1, 8, 32>}, {transform_indices = @transform_1, window_bounds = array<i64: 1, 8, 32>}, {pipeline_mode = #tpu.pipeline_mode<synchronous>, transform_indices = @transform_2, window_bounds = array<i64: 32, 32>}, {pipeline_mode = #tpu.pipeline_mode<synchronous>, transform_indices = @transform_3, window_bounds = array<i64: 32, 32>}, {pipeline_mode = #tpu.pipeline_mode<synchronous>, transform_indices = @transform_4, window_bounds = array<i64: 1, 32>}, {pipeline_mode = #tpu.pipeline_mode<synchronous>, transform_indices = @transform_5, window_bounds = array<i64: 1, 32>}, {pipeline_mode = #tpu.pipeline_mode<synchronous>, transform_indices = @transform_6, window_bounds = array<i64: 1, 32>}, {pipeline_mode = #tpu.pipeline_mode<synchronous>, transform_indices = @transform_7, window_bounds = array<i64: 1, 32>}, {pipeline_mode = #tpu.pipeline_mode<synchronous>, transform_indices = @transform_8, window_bounds = array<i64: 1, 32>}, {pipeline_mode = #tpu.pipeline_mode<synchronous>, transform_indices = @transform_9, window_bounds = array<i64: 32, 128>}, {pipeline_mode = #tpu.pipeline_mode<synchronous>, transform_indices = @transform_10, window_bounds = array<i64: 1, 128>}, {pipeline_mode = #tpu.pipeline_mode<synchronous>, transform_indices = @transform_11, window_bounds = array<i64: 128, 32>}, {pipeline_mode = #tpu.pipeline_mode<synchronous>, transform_indices = @transform_12, window_bounds = array<i64: 1, 32>}, {transform_indices = @transform_13, window_bounds = array<i64: 1, 8, 32>}]} {
    %c0 = arith.constant 0 : index
    %c0_0 = arith.constant 0 : index
    %c0_1 = arith.constant 0 : index
    %0 = vector.load %arg2[%c0, %c0_0, %c0_1] : memref<1x8x32xf32, #tpu.memory_space<vmem>>, vector<1x8x32xf32>
    %1 = vector.shape_cast %0 : vector<1x8x32xf32> to vector<8x32xf32>
    %c0_2 = arith.constant 0 : index
    %c0_3 = arith.constant 0 : index
    %2 = vector.load %arg7[%c0_2, %c0_3] : memref<1x32xf32, #tpu.memory_space<vmem>>, vector<1x32xf32>
    %c0_4 = arith.constant 0 : index
    %c0_5 = arith.constant 0 : index
    %3 = vector.load %arg8[%c0_4, %c0_5] : memref<1x32xf32, #tpu.memory_space<vmem>>, vector<1x32xf32>
    %cst = arith.constant dense<0.000000e+00> : vector<8xf32>
    %4 = vector.multi_reduction <add>, %1, %cst [1] : vector<8x32xf32> to vector<8xf32>
    %5 = vector.shape_cast %4 : vector<8xf32> to vector<8x1xf32>
    %cst_6 = arith.constant 3.200000e+01 : f32
    %6 = vector.broadcast %cst_6 : f32 to vector<8x1xf32>
    %7 = arith.divf %5, %6 : vector<8x1xf32>
    %8 = vector.broadcast %7 : vector<8x1xf32> to vector<8x32xf32>
    %9 = arith.subf %1, %8 : vector<8x32xf32>
    %10 = arith.mulf %9, %9 : vector<8x32xf32>
    %cst_7 = arith.constant dense<0.000000e+00> : vector<8xf32>
    %11 = vector.multi_reduction <add>, %10, %cst_7 [1] : vector<8x32xf32> to vector<8xf32>
    %12 = vector.shape_cast %11 : vector<8xf32> to vector<8x1xf32>
    %cst_8 = arith.constant 3.200000e+01 : f32
    %13 = vector.broadcast %cst_8 : f32 to vector<8x1xf32>
    %14 = arith.divf %12, %13 : vector<8x1xf32>
    %cst_9 = arith.constant 9.99999974E-6 : f32
    %15 = vector.broadcast %cst_9 : f32 to vector<8x1xf32>
    %16 = arith.addf %14, %15 : vector<8x1xf32>
    %17 = math.rsqrt %16 : vector<8x1xf32>
    %18 = vector.broadcast %17 : vector<8x1xf32> to vector<8x32xf32>
    %19 = arith.mulf %9, %18 : vector<8x32xf32>
    %20 = vector.broadcast %2 : vector<1x32xf32> to vector<8x32xf32>
    %21 = arith.mulf %19, %20 : vector<8x32xf32>
    %22 = vector.broadcast %3 : vector<1x32xf32> to vector<8x32xf32>
    %23 = arith.addf %21, %22 : vector<8x32xf32>
    %cst_10 = arith.constant dense<0.000000e+00> : vector<32xf32>
    %24 = vector.multi_reduction <add>, %23, %cst_10 [0] : vector<8x32xf32> to vector<32xf32>
    %25 = vector.shape_cast %24 : vector<32xf32> to vector<1x32xf32>
    %26 = arith.truncf %25 : vector<1x32xf32> to vector<1x32xbf16>
    %c0_11 = arith.constant 0 : index
    %c0_12 = arith.constant 0 : index
    %27 = vector.load %arg4[%c0_11, %c0_12] : memref<32x32xbf16, #tpu.memory_space<vmem>>, vector<32x32xbf16>
    %cst_13 = arith.constant dense<0.000000e+00> : vector<1x32xf32>
    %28 = tpu.matmul %26, %27, %cst_13 {dimension_numbers = #tpu.dot_dimension_numbers<[1], [0], [0], [1], [0, 0, 1, 1], [], []>} : vector<1x32xbf16>, vector<32x32xbf16>, vector<1x32xf32> -> vector<1x32xf32>
    %29 = arith.truncf %28 : vector<1x32xf32> to vector<1x32xbf16>
    %c0_14 = arith.constant 0 : index
    %c0_15 = arith.constant 0 : index
    %30 = vector.load %arg5[%c0_14, %c0_15] : memref<32x32xbf16, #tpu.memory_space<vmem>>, vector<32x32xbf16>
    %cst_16 = arith.constant dense<0.000000e+00> : vector<1x32xf32>
    %31 = tpu.matmul %29, %30, %cst_16 {dimension_numbers = #tpu.dot_dimension_numbers<[1], [0], [0], [1], [0, 0, 1, 1], [], []>} : vector<1x32xbf16>, vector<32x32xbf16>, vector<1x32xf32> -> vector<1x32xf32>
    %c0_17 = arith.constant 0 : index
    %c0_18 = arith.constant 0 : index
    %32 = vector.load %arg6[%c0_17, %c0_18] : memref<1x32xf32, #tpu.memory_space<vmem>>, vector<1x32xf32>
    %33 = arith.addf %31, %32 : vector<1x32xf32>
    %c0_19 = arith.constant 0 : index
    %c0_20 = arith.constant 0 : index
    %c0_21 = arith.constant 0 : index
    %34 = vector.load %arg3[%c0_19, %c0_20, %c0_21] : memref<1x8x32xf32, #tpu.memory_space<vmem>>, vector<1x8x32xf32>
    %35 = vector.shape_cast %34 : vector<1x8x32xf32> to vector<8x32xf32>
    %36 = vector.broadcast %33 : vector<1x32xf32> to vector<8x32xf32>
    %37 = arith.addf %35, %36 : vector<8x32xf32>
    %c0_22 = arith.constant 0 : index
    %c0_23 = arith.constant 0 : index
    %38 = vector.load %arg9[%c0_22, %c0_23] : memref<1x32xf32, #tpu.memory_space<vmem>>, vector<1x32xf32>
    %c0_24 = arith.constant 0 : index
    %c0_25 = arith.constant 0 : index
    %39 = vector.load %arg10[%c0_24, %c0_25] : memref<1x32xf32, #tpu.memory_space<vmem>>, vector<1x32xf32>
    %cst_26 = arith.constant dense<0.000000e+00> : vector<8xf32>
    %40 = vector.multi_reduction <add>, %37, %cst_26 [1] : vector<8x32xf32> to vector<8xf32>
    %41 = vector.shape_cast %40 : vector<8xf32> to vector<8x1xf32>
    %cst_27 = arith.constant 3.200000e+01 : f32
    %42 = vector.broadcast %cst_27 : f32 to vector<8x1xf32>
    %43 = arith.divf %41, %42 : vector<8x1xf32>
    %44 = vector.broadcast %43 : vector<8x1xf32> to vector<8x32xf32>
    %45 = arith.subf %37, %44 : vector<8x32xf32>
    %46 = arith.mulf %45, %45 : vector<8x32xf32>
    %cst_28 = arith.constant dense<0.000000e+00> : vector<8xf32>
    %47 = vector.multi_reduction <add>, %46, %cst_28 [1] : vector<8x32xf32> to vector<8xf32>
    %48 = vector.shape_cast %47 : vector<8xf32> to vector<8x1xf32>
    %cst_29 = arith.constant 3.200000e+01 : f32
    %49 = vector.broadcast %cst_29 : f32 to vector<8x1xf32>
    %50 = arith.divf %48, %49 : vector<8x1xf32>
    %cst_30 = arith.constant 9.99999974E-6 : f32
    %51 = vector.broadcast %cst_30 : f32 to vector<8x1xf32>
    %52 = arith.addf %50, %51 : vector<8x1xf32>
    %53 = math.rsqrt %52 : vector<8x1xf32>
    %54 = vector.broadcast %53 : vector<8x1xf32> to vector<8x32xf32>
    %55 = arith.mulf %45, %54 : vector<8x32xf32>
    %56 = vector.broadcast %38 : vector<1x32xf32> to vector<8x32xf32>
    %57 = arith.mulf %55, %56 : vector<8x32xf32>
    %58 = vector.broadcast %39 : vector<1x32xf32> to vector<8x32xf32>
    %59 = arith.addf %57, %58 : vector<8x32xf32>
    %60 = arith.truncf %59 : vector<8x32xf32> to vector<8x32xbf16>
    %c0_31 = arith.constant 0 : index
    %c0_32 = arith.constant 0 : index
    %61 = vector.load %arg11[%c0_31, %c0_32] : memref<32x128xbf16, #tpu.memory_space<vmem>>, vector<32x128xbf16>
    %cst_33 = arith.constant dense<0.000000e+00> : vector<8x128xf32>
    %62 = tpu.matmul %60, %61, %cst_33 {dimension_numbers = #tpu.dot_dimension_numbers<[1], [0], [0], [1], [0, 0, 1, 1], [], []>} : vector<8x32xbf16>, vector<32x128xbf16>, vector<8x128xf32> -> vector<8x128xf32>
    %c0_34 = arith.constant 0 : index
    %c0_35 = arith.constant 0 : index
    %63 = vector.load %arg12[%c0_34, %c0_35] : memref<1x128xf32, #tpu.memory_space<vmem>>, vector<1x128xf32>
    %64 = vector.broadcast %63 : vector<1x128xf32> to vector<8x128xf32>
    %65 = arith.addf %62, %64 : vector<8x128xf32>
    %cst_36 = arith.constant 5.000000e-01 : f32
    %66 = vector.broadcast %cst_36 : f32 to vector<8x128xf32>
    %67 = arith.mulf %66, %65 : vector<8x128xf32>
    %cst_37 = arith.constant 0.707106769 : f32
    %68 = vector.broadcast %cst_37 : f32 to vector<8x128xf32>
    %69 = arith.mulf %65, %68 : vector<8x128xf32>
    %70 = math.erf %69 : vector<8x128xf32>
    %cst_38 = arith.constant 1.000000e+00 : f32
    %71 = vector.broadcast %cst_38 : f32 to vector<8x128xf32>
    %72 = arith.addf %71, %70 : vector<8x128xf32>
    %73 = arith.mulf %67, %72 : vector<8x128xf32>
    %74 = arith.truncf %73 : vector<8x128xf32> to vector<8x128xbf16>
    %c0_39 = arith.constant 0 : index
    %c0_40 = arith.constant 0 : index
    %75 = vector.load %arg13[%c0_39, %c0_40] : memref<128x32xbf16, #tpu.memory_space<vmem>>, vector<128x32xbf16>
    %cst_41 = arith.constant dense<0.000000e+00> : vector<8x32xf32>
    %76 = tpu.matmul %74, %75, %cst_41 {dimension_numbers = #tpu.dot_dimension_numbers<[1], [0], [0], [1], [0, 0, 1, 1], [], []>} : vector<8x128xbf16>, vector<128x32xbf16>, vector<8x32xf32> -> vector<8x32xf32>
    %c0_42 = arith.constant 0 : index
    %c0_43 = arith.constant 0 : index
    %77 = vector.load %arg14[%c0_42, %c0_43] : memref<1x32xf32, #tpu.memory_space<vmem>>, vector<1x32xf32>
    %78 = vector.broadcast %77 : vector<1x32xf32> to vector<8x32xf32>
    %79 = arith.addf %76, %78 : vector<8x32xf32>
    %80 = arith.addf %37, %79 : vector<8x32xf32>
    %c0_44 = arith.constant 0 : index
    %c0_45 = arith.constant 0 : index
    %c0_46 = arith.constant 0 : index
    %81 = vector.load %arg15[%c0_44, %c0_45, %c0_46] : memref<1x8x32xf32, #tpu.memory_space<vmem>>, vector<1x8x32xf32>
    %82 = vector.shape_cast %81 : vector<1x8x32xf32> to vector<8x32xf32>
    %83 = vector.shape_cast %80 : vector<8x32xf32> to vector<1x8x32xf32>
    tpu.vector_store %arg15[%c0_44, %c0_45, %c0_46], %83 {strides = array<i32>} : memref<1x8x32xf32, #tpu.memory_space<vmem>>, vector<1x8x32xf32>,
    return
  }
  func.func @transform_0(%arg0: i32, %arg1: i32) -> (i32, i32, i32) {
    %c0_i32 = arith.constant 0 : i32
    %c0_i32_0 = arith.constant 0 : i32
    %c0_i32_1 = arith.constant 0 : i32
    return %arg0, %c0_i32, %c0_i32_0 : i32, i32, i32
  }
  func.func @transform_1(%arg0: i32, %arg1: i32) -> (i32, i32, i32) {
    %c0_i32 = arith.constant 0 : i32
    %c0_i32_0 = arith.constant 0 : i32
    return %arg0, %arg1, %c0_i32 : i32, i32, i32
  }
  func.func @transform_2(%arg0: i32, %arg1: i32) -> (i32, i32) {
    %c0_i32 = arith.constant 0 : i32
    %c0_i32_0 = arith.constant 0 : i32
    %c0_i32_1 = arith.constant 0 : i32
    return %c0_i32, %c0_i32_0 : i32, i32
  }
  func.func @transform_3(%arg0: i32, %arg1: i32) -> (i32, i32) {
    %c0_i32 = arith.constant 0 : i32
    %c0_i32_0 = arith.constant 0 : i32
    %c0_i32_1 = arith.constant 0 : i32
    return %c0_i32, %c0_i32_0 : i32, i32
  }
  func.func @transform_4(%arg0: i32, %arg1: i32) -> (i32, i32) {
    %c0_i32 = arith.constant 0 : i32
    %c0_i32_0 = arith.constant 0 : i32
    %c0_i32_1 = arith.constant 0 : i32
    return %c0_i32, %c0_i32_0 : i32, i32
  }
  func.func @transform_5(%arg0: i32, %arg1: i32) -> (i32, i32) {
    %c0_i32 = arith.constant 0 : i32
    %c0_i32_0 = arith.constant 0 : i32
    %c0_i32_1 = arith.constant 0 : i32
    return %c0_i32, %c0_i32_0 : i32, i32
  }
  func.func @transform_6(%arg0: i32, %arg1: i32) -> (i32, i32) {
    %c0_i32 = arith.constant 0 : i32
    %c0_i32_0 = arith.constant 0 : i32
    %c0_i32_1 = arith.constant 0 : i32
    return %c0_i32, %c0_i32_0 : i32, i32
  }
  func.func @transform_7(%arg0: i32, %arg1: i32) -> (i32, i32) {
    %c0_i32 = arith.constant 0 : i32
    %c0_i32_0 = arith.constant 0 : i32
    %c0_i32_1 = arith.constant 0 : i32
    return %c0_i32, %c0_i32_0 : i32, i32
  }
  func.func @transform_8(%arg0: i32, %arg1: i32) -> (i32, i32) {
    %c0_i32 = arith.constant 0 : i32
    %c0_i32_0 = arith.constant 0 : i32
    %c0_i32_1 = arith.constant 0 : i32
    return %c0_i32, %c0_i32_0 : i32, i32
  }
  func.func @transform_9(%arg0: i32, %arg1: i32) -> (i32, i32) {
    %c0_i32 = arith.constant 0 : i32
    %c0_i32_0 = arith.constant 0 : i32
    %c0_i32_1 = arith.constant 0 : i32
    return %c0_i32, %c0_i32_0 : i32, i32
  }
  func.func @transform_10(%arg0: i32, %arg1: i32) -> (i32, i32) {
    %c0_i32 = arith.constant 0 : i32
    %c0_i32_0 = arith.constant 0 : i32
    %c0_i32_1 = arith.constant 0 : i32
    return %c0_i32, %c0_i32_0 : i32, i32
  }
  func.func @transform_11(%arg0: i32, %arg1: i32) -> (i32, i32) {
    %c0_i32 = arith.constant 0 : i32
    %c0_i32_0 = arith.constant 0 : i32
    %c0_i32_1 = arith.constant 0 : i32
    return %c0_i32, %c0_i32_0 : i32, i32
  }
  func.func @transform_12(%arg0: i32, %arg1: i32) -> (i32, i32) {
    %c0_i32 = arith.constant 0 : i32
    %c0_i32_0 = arith.constant 0 : i32
    %c0_i32_1 = arith.constant 0 : i32
    return %c0_i32, %c0_i32_0 : i32, i32
  }
  func.func @transform_13(%arg0: i32, %arg1: i32) -> (i32, i32, i32) {
    %c0_i32 = arith.constant 0 : i32
    %c0_i32_0 = arith.constant 0 : i32
    return %arg0, %arg1, %c0_i32 : i32, i32, i32
  }
}

</mosaic_0001>

<llo_original>
// kernel: tpu_custom_call.1
$region0: #{tpu_custom_call.1}
  #allocation0 [shape = 'u32[]', space=smem, size = 0x4, offset = 0x4, fixed_abs, tag = 'smem constant byte address 0x4 - core index']
  #allocation1 [shape = 'u32[144,128]{1,0:T(1,128)}', space=vmem, size = 0x12000, scoped, tag = 'internal scratch']
  %s0 = inlined_call_operand.vmem [shape: f32[2,8,32], index: 0, kind: input, shape index: {}]
  %s1 = inlined_call_operand.vmem [shape: f32[2,8,32], index: 1, kind: input, shape index: {}]
  %s2 = inlined_call_operand.vmem [shape: bf16[32,32], index: 2, kind: input, shape index: {}]
  %s3 = inlined_call_operand.vmem [shape: bf16[32,32], index: 3, kind: input, shape index: {}]
  %s4 = inlined_call_operand.vmem [shape: f32[1,32], index: 4, kind: input, shape index: {}]
  %s5 = inlined_call_operand.vmem [shape: f32[1,32], index: 5, kind: input, shape index: {}]
  %s6 = inlined_call_operand.vmem [shape: f32[1,32], index: 6, kind: input, shape index: {}]
  %s7 = inlined_call_operand.vmem [shape: f32[1,32], index: 7, kind: input, shape index: {}]
  %s8 = inlined_call_operand.vmem [shape: f32[1,32], index: 8, kind: input, shape index: {}]
  %s9 = inlined_call_operand.vmem [shape: bf16[32,128], index: 9, kind: input, shape index: {}]
  %s10 = inlined_call_operand.vmem [shape: f32[1,128], index: 10, kind: input, shape index: {}]
  %s11 = inlined_call_operand.vmem [shape: bf16[128,32], index: 11, kind: input, shape index: {}]
  %s12 = inlined_call_operand.vmem [shape: f32[1,32], index: 12, kind: input, shape index: {}]
  %s13 = inlined_call_operand.hbm [shape: f32[2,8,32], index: 13, kind: output, shape index: {}]
  %s14 = sld [smem:[#allocation0]]
  $region85: #{tpu_custom_call.1} parent=0
    _
  %s16 = ssub.s32 1, %s14
  %s17 = scalar_select 0, %s16, %s14
  $region1: #{tpu_custom_call.1} parent=0
    #allocation2 [shape = 'u8[8192]{0}', space=vmem, size = 0x2000, scoped, tag = 'output window, operand 0']
    #allocation3 [shape = 's32[2]{0}', space=sflag, size = 0x8, scoped, tag = 'scoped memory for tpu_custom_call.1']
    %18 = vsyncpa [#allocation3], 0
    %s19 = scalar_lea.sflag [#allocation3], 1
    %20 = vsyncpa %s19, 0
    loop: start=0, step=1, limit=4
    $region2: #{tpu_custom_call.1} parent=1 // loop_pre_header
      _
    $region3: #{tpu_custom_call.1} parent=1 // loop_header
      %s22 = sphi 0, %s26
      %p23 = scmp.ge.s32.totalorder %s22, 4
      %s29 = sphi 0, %s41
      %s30 = sphi 0, %s37
      %s31 = sphi 0, %s29
      %s32 = sphi 0, %s30
      %s33 = sphi 0, %s31
      %s34 = sphi 0, %s32
      %s44 = sphi 0, %s46
      %s47 = sphi 0, %s44
      %s48 = sphi 0, %s47
      %s64 = sphi 0, %s48
      %s72 = sphi 0, %s74
      %s75 = sphi 0, %s72
      %s76 = sphi 0, %s75
      %s92 = sphi 0, %s76
      %s96 = sphi 0, %s96
      %s98 = sphi 0, %s96
      %s99 = sphi 0, %s98
      %s113 = sphi 0, %s99
      %s117 = sphi 0, %s117
      %s119 = sphi 0, %s117
      %s120 = sphi 0, %s119
      %s134 = sphi 0, %s120
      %s138 = sphi 0, %s138
      %s140 = sphi 0, %s138
      %s141 = sphi 0, %s140
      %s155 = sphi 0, %s141
      %s159 = sphi 0, %s159
      %s161 = sphi 0, %s159
      %s162 = sphi 0, %s161
      %s176 = sphi 0, %s162
      %s180 = sphi 0, %s180
      %s182 = sphi 0, %s180
      %s183 = sphi 0, %s182
      %s197 = sphi 0, %s183
      %s201 = sphi 0, %s201
      %s203 = sphi 0, %s201
      %s204 = sphi 0, %s203
      %s218 = sphi 0, %s204
      %s222 = sphi 0, %s222
      %s224 = sphi 0, %s222
      %s225 = sphi 0, %s224
      %s239 = sphi 0, %s225
      %s243 = sphi 0, %s243
      %s245 = sphi 0, %s243
      %s246 = sphi 0, %s245
      %s260 = sphi 0, %s246
      %s264 = sphi 0, %s264
      %s266 = sphi 0, %s264
      %s267 = sphi 0, %s266
      %s281 = sphi 0, %s267
      %s285 = sphi 0, %s285
      %s287 = sphi 0, %s285
      %s288 = sphi 0, %s287
      %s302 = sphi 0, %s288
      %s306 = sphi 0, %s306
      %s308 = sphi 0, %s306
      %s309 = sphi 0, %s308
      %s323 = sphi 0, %s309
      %s331 = sphi 0, %s333
      %s334 = sphi 0, %s331
      %s335 = sphi 0, %s334
      %s351 = sphi 0, %s335
    $region4: #{tpu_custom_call.1} parent=1 // loop_header_branch
      %25 = sbr.rel (%p23) target = $region8
    $region5: #{tpu_custom_call.1} parent=1 // loop_body
      %s27 = ssub.s32 %s22, 1
      %s28 = ssub.s32 %s22, 2
      %s35 = sadd.s32 1, %s30
      %p36 = scmp.ge.s32.totalorder %s35, 1
      %s37 = scalar_select %p36, 0, %s35
      %s38 = sadd.s32 1, %s29
      %s39 = scalar_select %p36, %s38, %s29
      %p40 = scmp.ge.s32.totalorder %s39, 2
      %s41 = scalar_select %p40, 0, %s39
      %s42 = ssub.s32 %s29, %s41
      %p43 = scmp.eq.s32.totalorder %s42, 0
      %s45 = sadd.s32 %s44, 1
      %s46 = scalar_select %p43, %s44, %s45
      %p49 = pneg %p43
      %p50 = scmp.eq.s32.totalorder %s22, 1
      %p51 = por %p49, %p50
      %p52 = scmp.ne.s32.totalorder %s44, %s47
      %p53 = scmp.eq.s32.totalorder %s22, 0
      %p54 = por %p52, %p53
      %p55 = scmp.ne.s32.totalorder %s44, %s47
      %p56 = scmp.eq.s32.totalorder %s27, 1
      %p57 = por %p55, %p56
      %p58 = scmp.ne.s32.totalorder %s47, %s48
      %p59 = scmp.eq.s32.totalorder %s27, 0
      %p60 = por %p58, %p59
      %p61 = scmp.ne.s32.totalorder %s47, %s48
      %p62 = scmp.eq.s32.totalorder %s28, 1
      %p63 = por %p61, %p62
      %p65 = scmp.ne.s32.totalorder %s48, %s64
      %p66 = scmp.eq.s32.totalorder %s28, 0
      %p67 = por %p65, %p66
      %s68 = ssub.s32 %s29, %s41
      %s69 = ssub.s32 %s30, %s37
      %s70 = sor.u32 %s68, %s69
      %p71 = scmp.eq.s32.totalorder %s70, 0
      %s73 = sadd.s32 %s72, 1
      %s74 = scalar_select %p71, %s72, %s73
      %p77 = pneg %p71
      %p78 = scmp.eq.s32.totalorder %s22, 1
      %p79 = por %p77, %p78
      %p80 = scmp.ne.s32.totalorder %s72, %s75
      %p81 = scmp.eq.s32.totalorder %s22, 0
      %p82 = por %p80, %p81
      %p83 = scmp.ne.s32.totalorder %s72, %s75
      %p84 = scmp.eq.s32.totalorder %s27, 1
      %p85 = por %p83, %p84
      %p86 = scmp.ne.s32.totalorder %s75, %s76
      %p87 = scmp.eq.s32.totalorder %s27, 0
      %p88 = por %p86, %p87
      %p89 = scmp.ne.s32.totalorder %s75, %s76
      %p90 = scmp.eq.s32.totalorder %s28, 1
      %p91 = por %p89, %p90
      %p93 = scmp.ne.s32.totalorder %s76, %s92
      %p94 = scmp.eq.s32.totalorder %s28, 0
      %p95 = por %p93, %p94
      %s97 = sadd.s32 %s96, 1
      %p100 = scmp.eq.s32.totalorder %s22, 1
      %p101 = scmp.ne.s32.totalorder %s96, %s98
      %p102 = scmp.eq.s32.totalorder %s22, 0
      %p103 = por %p101, %p102
      %p104 = scmp.ne.s32.totalorder %s96, %s98
      %p105 = scmp.eq.s32.totalorder %s27, 1
      %p106 = por %p104, %p105
      %p107 = scmp.ne.s32.totalorder %s98, %s99
      %p108 = scmp.eq.s32.totalorder %s27, 0
      %p109 = por %p107, %p108
      %p110 = scmp.ne.s32.totalorder %s98, %s99
      %p111 = scmp.eq.s32.totalorder %s28, 1
      %p112 = por %p110, %p111
      %p114 = scmp.ne.s32.totalorder %s99, %s113
      %p115 = scmp.eq.s32.totalorder %s28, 0
      %p116 = por %p114, %p115
      %s118 = sadd.s32 %s117, 1
      %p121 = scmp.eq.s32.totalorder %s22, 1
      %p122 = scmp.ne.s32.totalorder %s117, %s119
      %p123 = scmp.eq.s32.totalorder %s22, 0
      %p124 = por %p122, %p123
      %p125 = scmp.ne.s32.totalorder %s117, %s119
      %p126 = scmp.eq.s32.totalorder %s27, 1
      %p127 = por %p125, %p126
      %p128 = scmp.ne.s32.totalorder %s119, %s120
      %p129 = scmp.eq.s32.totalorder %s27, 0
      %p130 = por %p128, %p129
      %p131 = scmp.ne.s32.totalorder %s119, %s120
      %p132 = scmp.eq.s32.totalorder %s28, 1
      %p133 = por %p131, %p132
      %p135 = scmp.ne.s32.totalorder %s120, %s134
      %p136 = scmp.eq.s32.totalorder %s28, 0
      %p137 = por %p135, %p136
      %s139 = sadd.s32 %s138, 1
      %p142 = scmp.eq.s32.totalorder %s22, 1
      %p143 = scmp.ne.s32.totalorder %s138, %s140
      %p144 = scmp.eq.s32.totalorder %s22, 0
      %p145 = por %p143, %p144
      %p146 = scmp.ne.s32.totalorder %s138, %s140
      %p147 = scmp.eq.s32.totalorder %s27, 1
      %p148 = por %p146, %p147
      %p149 = scmp.ne.s32.totalorder %s140, %s141
      %p150 = scmp.eq.s32.totalorder %s27, 0
      %p151 = por %p149, %p150
      %p152 = scmp.ne.s32.totalorder %s140, %s141
      %p153 = scmp.eq.s32.totalorder %s28, 1
      %p154 = por %p152, %p153
      %p156 = scmp.ne.s32.totalorder %s141, %s155
      %p157 = scmp.eq.s32.totalorder %s28, 0
      %p158 = por %p156, %p157
      %s160 = sadd.s32 %s159, 1
      %p163 = scmp.eq.s32.totalorder %s22, 1
      %p164 = scmp.ne.s32.totalorder %s159, %s161
      %p165 = scmp.eq.s32.totalorder %s22, 0
      %p166 = por %p164, %p165
      %p167 = scmp.ne.s32.totalorder %s159, %s161
      %p168 = scmp.eq.s32.totalorder %s27, 1
      %p169 = por %p167, %p168
      %p170 = scmp.ne.s32.totalorder %s161, %s162
      %p171 = scmp.eq.s32.totalorder %s27, 0
      %p172 = por %p170, %p171
      %p173 = scmp.ne.s32.totalorder %s161, %s162
      %p174 = scmp.eq.s32.totalorder %s28, 1
      %p175 = por %p173, %p174
      %p177 = scmp.ne.s32.totalorder %s162, %s176
      %p178 = scmp.eq.s32.totalorder %s28, 0
      %p179 = por %p177, %p178
      %s181 = sadd.s32 %s180, 1
      %p184 = scmp.eq.s32.totalorder %s22, 1
      %p185 = scmp.ne.s32.totalorder %s180, %s182
      %p186 = scmp.eq.s32.totalorder %s22, 0
      %p187 = por %p185, %p186
      %p188 = scmp.ne.s32.totalorder %s180, %s182
      %p189 = scmp.eq.s32.totalorder %s27, 1
      %p190 = por %p188, %p189
      %p191 = scmp.ne.s32.totalorder %s182, %s183
      %p192 = scmp.eq.s32.totalorder %s27, 0
      %p193 = por %p191, %p192
      %p194 = scmp.ne.s32.totalorder %s182, %s183
      %p195 = scmp.eq.s32.totalorder %s28, 1
      %p196 = por %p194, %p195
      %p198 = scmp.ne.s32.totalorder %s183, %s197
      %p199 = scmp.eq.s32.totalorder %s28, 0
      %p200 = por %p198, %p199
      %s202 = sadd.s32 %s201, 1
      %p205 = scmp.eq.s32.totalorder %s22, 1
      %p206 = scmp.ne.s32.totalorder %s201, %s203
      %p207 = scmp.eq.s32.totalorder %s22, 0
      %p208 = por %p206, %p207
      %p209 = scmp.ne.s32.totalorder %s201, %s203
      %p210 = scmp.eq.s32.totalorder %s27, 1
      %p211 = por %p209, %p210
      %p212 = scmp.ne.s32.totalorder %s203, %s204
      %p213 = scmp.eq.s32.totalorder %s27, 0
      %p214 = por %p212, %p213
      %p215 = scmp.ne.s32.totalorder %s203, %s204
      %p216 = scmp.eq.s32.totalorder %s28, 1
      %p217 = por %p215, %p216
      %p219 = scmp.ne.s32.totalorder %s204, %s218
      %p220 = scmp.eq.s32.totalorder %s28, 0
      %p221 = por %p219, %p220
      %s223 = sadd.s32 %s222, 1
      %p226 = scmp.eq.s32.totalorder %s22, 1
      %p227 = scmp.ne.s32.totalorder %s222, %s224
      %p228 = scmp.eq.s32.totalorder %s22, 0
      %p229 = por %p227, %p228
      %p230 = scmp.ne.s32.totalorder %s222, %s224
      %p231 = scmp.eq.s32.totalorder %s27, 1
      %p232 = por %p230, %p231
      %p233 = scmp.ne.s32.totalorder %s224, %s225
      %p234 = scmp.eq.s32.totalorder %s27, 0
      %p235 = por %p233, %p234
      %p236 = scmp.ne.s32.totalorder %s224, %s225
      %p237 = scmp.eq.s32.totalorder %s28, 1
      %p238 = por %p236, %p237
      %p240 = scmp.ne.s32.totalorder %s225, %s239
      %p241 = scmp.eq.s32.totalorder %s28, 0
      %p242 = por %p240, %p241
      %s244 = sadd.s32 %s243, 1
      %p247 = scmp.eq.s32.totalorder %s22, 1
      %p248 = scmp.ne.s32.totalorder %s243, %s245
      %p249 = scmp.eq.s32.totalorder %s22, 0
      %p250 = por %p248, %p249
      %p251 = scmp.ne.s32.totalorder %s243, %s245
      %p252 = scmp.eq.s32.totalorder %s27, 1
      %p253 = por %p251, %p252
      %p254 = scmp.ne.s32.totalorder %s245, %s246
      %p255 = scmp.eq.s32.totalorder %s27, 0
      %p256 = por %p254, %p255
      %p257 = scmp.ne.s32.totalorder %s245, %s246
      %p258 = scmp.eq.s32.totalorder %s28, 1
      %p259 = por %p257, %p258
      %p261 = scmp.ne.s32.totalorder %s246, %s260
      %p262 = scmp.eq.s32.totalorder %s28, 0
      %p263 = por %p261, %p262
      %s265 = sadd.s32 %s264, 1
      %p268 = scmp.eq.s32.totalorder %s22, 1
      %p269 = scmp.ne.s32.totalorder %s264, %s266
      %p270 = scmp.eq.s32.totalorder %s22, 0
      %p271 = por %p269, %p270
      %p272 = scmp.ne.s32.totalorder %s264, %s266
      %p273 = scmp.eq.s32.totalorder %s27, 1
      %p274 = por %p272, %p273
      %p275 = scmp.ne.s32.totalorder %s266, %s267
      %p276 = scmp.eq.s32.totalorder %s27, 0
      %p277 = por %p275, %p276
      %p278 = scmp.ne.s32.totalorder %s266, %s267
      %p279 = scmp.eq.s32.totalorder %s28, 1
      %p280 = por %p278, %p279
      %p282 = scmp.ne.s32.totalorder %s267, %s281
      %p283 = scmp.eq.s32.totalorder %s28, 0
      %p284 = por %p282, %p283
      %s286 = sadd.s32 %s285, 1
      %p289 = scmp.eq.s32.totalorder %s22, 1
      %p290 = scmp.ne.s32.totalorder %s285, %s287
      %p291 = scmp.eq.s32.totalorder %s22, 0
      %p292 = por %p290, %p291
      %p293 = scmp.ne.s32.totalorder %s285, %s287
      %p294 = scmp.eq.s32.totalorder %s27, 1
      %p295 = por %p293, %p294
      %p296 = scmp.ne.s32.totalorder %s287, %s288
      %p297 = scmp.eq.s32.totalorder %s27, 0
      %p298 = por %p296, %p297
      %p299 = scmp.ne.s32.totalorder %s287, %s288
      %p300 = scmp.eq.s32.totalorder %s28, 1
      %p301 = por %p299, %p300
      %p303 = scmp.ne.s32.totalorder %s288, %s302
      %p304 = scmp.eq.s32.totalorder %s28, 0
      %p305 = por %p303, %p304
      %s307 = sadd.s32 %s306, 1
      %p310 = scmp.eq.s32.totalorder %s22, 1
      %p311 = scmp.ne.s32.totalorder %s306, %s308
      %p312 = scmp.eq.s32.totalorder %s22, 0
      %p313 = por %p311, %p312
      %p314 = scmp.ne.s32.totalorder %s306, %s308
      %p315 = scmp.eq.s32.totalorder %s27, 1
      %p316 = por %p314, %p315
      %p317 = scmp.ne.s32.totalorder %s308, %s309
      %p318 = scmp.eq.s32.totalorder %s27, 0
      %p319 = por %p317, %p318
      %p320 = scmp.ne.s32.totalorder %s308, %s309
      %p321 = scmp.eq.s32.totalorder %s28, 1
      %p322 = por %p320, %p321
      %p324 = scmp.ne.s32.totalorder %s309, %s323
      %p325 = scmp.eq.s32.totalorder %s28, 0
      %p326 = por %p324, %p325
      %s327 = ssub.s32 %s29, %s41
      %s328 = ssub.s32 %s30, %s37
      %s329 = sor.u32 %s327, %s328
      %p330 = scmp.eq.s32.totalorder %s329, 0
      %s332 = sadd.s32 %s331, 1
      %s333 = scalar_select %p330, %s331, %s332
      %p336 = pneg %p330
      %p337 = scmp.eq.s32.totalorder %s22, 1
      %p338 = por %p336, %p337
      %p339 = scmp.ne.s32.totalorder %s331, %s334
      %p340 = scmp.eq.s32.totalorder %s22, 0
      %p341 = por %p339, %p340
      %p342 = scmp.ne.s32.totalorder %s331, %s334
      %p343 = scmp.eq.s32.totalorder %s27, 1
      %p344 = por %p342, %p343
      %p345 = scmp.ne.s32.totalorder %s334, %s335
      %p346 = scmp.eq.s32.totalorder %s27, 0
      %p347 = por %p345, %p346
      %p348 = scmp.ne.s32.totalorder %s334, %s335
      %p349 = scmp.eq.s32.totalorder %s28, 1
      %p350 = por %p348, %p349
      %p352 = scmp.ne.s32.totalorder %s335, %s351
      %p353 = scmp.eq.s32.totalorder %s28, 0
      %p354 = por %p352, %p353
      %p355 = scmp.le.s32.totalorder 1, %s22
      %p356 = scmp.lt.s32.totalorder %s22, 3
      %p357 = pnand %p355, %p356
      %p358 = pneg %p357
      // Predicated region
      $region9: #{tpu_custom_call.1} parent=5 // pred_check
        _
      $region10: #{tpu_custom_call.1} parent=5 // pred_check_branch
        %360 = sbr.rel (%p357) target = $region12
      $region11: #{tpu_custom_call.1} parent=5 // pred_region
        %s361 = ssub.s32 %s22, 1
        // Predicated region
        $region13: #{tpu_custom_call.1} parent=11 // pred_check
          %p362 = pneg %p109
        $region14: #{tpu_custom_call.1} parent=11 // pred_check_branch
          %364 = sbr.rel (%p362) target = $region16
        $region15: #{tpu_custom_call.1} parent=11 // pred_region
          _
        $region16: #{tpu_custom_call.1} parent=11 // pred_fallthru
          _
        // Predicated region
        $region17: #{tpu_custom_call.1} parent=11 // pred_check
          %p365 = pneg %p130
        $region18: #{tpu_custom_call.1} parent=11 // pred_check_branch
          %367 = sbr.rel (%p365) target = $region20
        $region19: #{tpu_custom_call.1} parent=11 // pred_region
          _
        $region20: #{tpu_custom_call.1} parent=11 // pred_fallthru
          _
        // Predicated region
        $region21: #{tpu_custom_call.1} parent=11 // pred_check
          %p368 = pneg %p151
        $region22: #{tpu_custom_call.1} parent=11 // pred_check_branch
          %370 = sbr.rel (%p368) target = $region24
        $region23: #{tpu_custom_call.1} parent=11 // pred_region
          _
        $region24: #{tpu_custom_call.1} parent=11 // pred_fallthru
          _
        // Predicated region
        $region25: #{tpu_custom_call.1} parent=11 // pred_check
          %p371 = pneg %p172
        $region26: #{tpu_custom_call.1} parent=11 // pred_check_branch
          %373 = sbr.rel (%p371) target = $region28
        $region27: #{tpu_custom_call.1} parent=11 // pred_region
          _
        $region28: #{tpu_custom_call.1} parent=11 // pred_fallthru
          _
        // Predicated region
        $region29: #{tpu_custom_call.1} parent=11 // pred_check
          %p374 = pneg %p193
        $region30: #{tpu_custom_call.1} parent=11 // pred_check_branch
          %376 = sbr.rel (%p374) target = $region32
        $region31: #{tpu_custom_call.1} parent=11 // pred_region
          _
        $region32: #{tpu_custom_call.1} parent=11 // pred_fallthru
          _
        // Predicated region
        $region33: #{tpu_custom_call.1} parent=11 // pred_check
          %p377 = pneg %p214
        $region34: #{tpu_custom_call.1} parent=11 // pred_check_branch
          %379 = sbr.rel (%p377) target = $region36
        $region35: #{tpu_custom_call.1} parent=11 // pred_region
          _
        $region36: #{tpu_custom_call.1} parent=11 // pred_fallthru
          _
        // Predicated region
        $region37: #{tpu_custom_call.1} parent=11 // pred_check
          %p380 = pneg %p235
        $region38: #{tpu_custom_call.1} parent=11 // pred_check_branch
          %382 = sbr.rel (%p380) target = $region40
        $region39: #{tpu_custom_call.1} parent=11 // pred_region
          _
        $region40: #{tpu_custom_call.1} parent=11 // pred_fallthru
          _
        // Predicated region
        $region41: #{tpu_custom_call.1} parent=11 // pred_check
          %p383 = pneg %p256
        $region42: #{tpu_custom_call.1} parent=11 // pred_check_branch
          %385 = sbr.rel (%p383) target = $region44
        $region43: #{tpu_custom_call.1} parent=11 // pred_region
          _
        $region44: #{tpu_custom_call.1} parent=11 // pred_fallthru
          _
        // Predicated region
        $region45: #{tpu_custom_call.1} parent=11 // pred_check
          %p386 = pneg %p277
        $region46: #{tpu_custom_call.1} parent=11 // pred_check_branch
          %388 = sbr.rel (%p386) target = $region48
        $region47: #{tpu_custom_call.1} parent=11 // pred_region
          _
        $region48: #{tpu_custom_call.1} parent=11 // pred_fallthru
          _
        // Predicated region
        $region49: #{tpu_custom_call.1} parent=11 // pred_check
          %p389 = pneg %p298
        $region50: #{tpu_custom_call.1} parent=11 // pred_check_branch
          %391 = sbr.rel (%p389) target = $region52
        $region51: #{tpu_custom_call.1} parent=11 // pred_region
          _
        $region52: #{tpu_custom_call.1} parent=11 // pred_fallthru
          _
        // Predicated region
        $region53: #{tpu_custom_call.1} parent=11 // pred_check
          %p392 = pneg %p319
        $region54: #{tpu_custom_call.1} parent=11 // pred_check_branch
          %394 = sbr.rel (%p392) target = $region56
        $region55: #{tpu_custom_call.1} parent=11 // pred_region
          _
        $region56: #{tpu_custom_call.1} parent=11 // pred_fallthru
          _
      $region12: #{tpu_custom_call.1} parent=5 // pred_fallthru
        _
      %p395 = scmp.lt.s32.totalorder %s22, 2
      // Predicated region
      $region57: #{tpu_custom_call.1} parent=5 // pred_check
        %p396 = pneg %p395
      $region58: #{tpu_custom_call.1} parent=5 // pred_check_branch
        %398 = sbr.rel (%p396) target = $region60
      $region59: #{tpu_custom_call.1} parent=5 // pred_region
        // Predicated region
        $region61: #{tpu_custom_call.1} parent=59 // pred_check
          %p399 = pneg %p54
        $region62: #{tpu_custom_call.1} parent=59 // pred_check_branch
          %401 = sbr.rel (%p399) target = $region64
        $region63: #{tpu_custom_call.1} parent=59 // pred_region
          %p402 = scmp.lt.s32.totalorder %s29, 1
          %s403 = scalar_select %p402, %s29, 1
          %s404 = smul.addr %s403, 8
          %s405 = scalar_lea.vmem %s0, %s404
        $region64: #{tpu_custom_call.1} parent=59 // pred_fallthru
          _
        // Predicated region
        $region65: #{tpu_custom_call.1} parent=59 // pred_check
          %p406 = pneg %p82
        $region66: #{tpu_custom_call.1} parent=59 // pred_check_branch
          %408 = sbr.rel (%p406) target = $region68
        $region67: #{tpu_custom_call.1} parent=59 // pred_region
          %p409 = scmp.lt.s32.totalorder %s29, 1
          %s410 = scalar_select %p409, %s29, 1
          %p411 = scmp.lt.s32.totalorder %s30, 0
          %s412 = scalar_select %p411, %s30, 0
          %s413 = sadd.s32 %s412, %s410
          %s414 = smul.addr %s413, 8
          %s415 = scalar_lea.vmem %s1, %s414
        $region68: #{tpu_custom_call.1} parent=59 // pred_fallthru
          _
      $region60: #{tpu_custom_call.1} parent=5 // pred_fallthru
        _
      %p416 = scmp.le.s32.totalorder 1, %s22
      %p417 = scmp.lt.s32.totalorder %s22, 3
      %p418 = pnand %p416, %p417
      %p419 = pneg %p418
      // Predicated region
      $region69: #{tpu_custom_call.1} parent=5 // pred_check
        _
      $region70: #{tpu_custom_call.1} parent=5 // pred_check_branch
        %421 = sbr.rel (%p418) target = $region72
      $region71: #{tpu_custom_call.1} parent=5 // pred_region
        %s422 = ssub.s32 %s22, 1
        %p423 = scmp.lt.s32.totalorder %s31, 1
        %s424 = scalar_select %p423, %s31, 1
        %s425 = smul.addr %s424, 8
        %s426 = scalar_lea.vmem %s0, %s425
        %p427 = pneg %p60
        %p428 = pneg %p57
        %p429 = scmp.lt.s32.totalorder %s31, 1
        %s430 = scalar_select %p429, %s31, 1
        %p431 = scmp.lt.s32.totalorder %s32, 0
        %s432 = scalar_select %p431, %s32, 0
        %s433 = sadd.s32 %s432, %s430
        %s434 = smul.addr %s433, 8
        %s435 = scalar_lea.vmem %s1, %s434
        %p436 = pneg %p88
        %p437 = pneg %p85
        %p438 = pneg %p109
        %p439 = pneg %p106
        %p440 = pneg %p130
        %p441 = pneg %p127
        %p442 = pneg %p151
        %p443 = pneg %p148
        %p444 = pneg %p172
        %p445 = pneg %p169
        %p446 = pneg %p193
        %p447 = pneg %p190
        %p448 = pneg %p214
        %p449 = pneg %p211
        %p450 = pneg %p235
        %p451 = pneg %p232
        %p452 = pneg %p256
        %p453 = pneg %p253
        %p454 = pneg %p277
        %p455 = pneg %p274
        %p456 = pneg %p298
        %p457 = pneg %p295
        %p458 = pneg %p319
        %p459 = pneg %p316
        %p460 = pneg %p347
        %p461 = pneg %p344
        %s462 = sand.u32 %s334, 1
        %s463 = scalar_lea.sflag [#allocation3], %s462
        %s464 = sand.u32 %s334, 1
        %s465 = smul.addr %s464, 8
        %s466 = scalar_lea.vmem [#allocation2], %s465
        %p467 = scmp.lt.s32.totalorder %s31, 1
        %s468 = scalar_select %p467, %s31, 1
        %s469 = smul.addr %s468, 8
        %s470 = scalar_lea.vmem %s0, %s469
        %p471 = scmp.lt.s32.totalorder %s31, 1
        %s472 = scalar_select %p471, %s31, 1
        %p473 = scmp.lt.s32.totalorder %s32, 0
        %s474 = scalar_select %p473, %s32, 0
        %s475 = sadd.s32 %s474, %s472
        %s476 = smul.addr %s475, 8
        %s477 = scalar_lea.vmem %s1, %s476
        %v479 = vld [vmem:[%s470] sm:$0xff]
        %v480 = vld [vmem:[%s5] sm:$0x1]
        %v481 = vld [vmem:[%s6] sm:$0x1]
        %vm482 = vcmask 261120
        %v483 = vsel %vm482, %v479, 0.0
        %484 = vadd.xlane.f32.xlu0 %v483
        %v485 = vpop.xlane.xlu0 %484
        %v486 = vrcp.pop 32.0
        %v487 = vmul.f32 %v485, %v486
        %v488 = vsub.f32 %v479, %v487
        %v489 = vmul.f32 %v488, %v488
        %v490 = vsel %vm482, %v489, 0.0
        %491 = vadd.xlane.f32.xlu0 %v490
        %v492 = vpop.xlane.xlu0 %491
        %v493 = vmul.f32 %v492, %v486
        %v494 = vadd.f32 %v493, 1e-05
        %v495 = vrsqrt.pop %v494
        %v496 = vmul.f32 %v488, %v495
        %v498 = vlaneseq
        %v499 = vshrl.u32 %v498, 7
        %v500 = vsub.s32 0, %v499
        %v501 = vrot.slane %v480, %v500
        %v503 = vmul.f32 %v496, %v501
        %v505 = vlaneseq
        %v506 = vshrl.u32 %v505, 7
        %v507 = vsub.s32 0, %v506
        %v508 = vrot.slane %v481, %v507
        %v510 = vadd.f32 %v503, %v508
        %v511 = vsel %vm482, %v510, 0.0
        %v512 = vrot.slane %v511, 4
        %v513 = vadd.f32 %v511, %v512
        %v514 = vrot.slane %v513, 2
        %v515 = vadd.f32 %v513, %v514
        %v516 = vrot.slane %v515, 1
        %v517 = vadd.f32 %v515, %v516
        %v518 = vpack.c.bf16 %v517, %v517
        %v519 = vld [vmem:[%s2] sm:$0xf]
        %v520 = vld [vmem:[%s2 + $0x4] sm:$0xf]
        %v521 = vld [vmem:[%s2 + $0x8] sm:$0xf]
        %v522 = vld [vmem:[%s2 + $0xc] sm:$0xf]
        %v527 = vunpack.c.l.b16 %v519
        %v528 = vunpack.c.l.b16 %v520
        %v529 = vunpack.c.l.b16 %v521
        %v530 = vunpack.c.l.b16 %v522
        %v531 = vpack.c.b16 %v528, %v527
        %v532 = vpack.c.b16 %v530, %v529
        %v536 = vsel %vm482, %v518, 0
        %538 = vmatprep.subr.bf16.mxu0 0
        %539 = vmatpush1.bf16.msra.mxu0 %v531
        %540 = vmatprep.subr.bf16.mxu0 0
        %541 = vmatpush1.bf16.msra.mxu0 %v532
        %542 = vmatprep.subr.bf16.mxu0 0
        %543 = vmatpush1.bf16.msra.mxu0 0
        %544 = vmatprep.subr.bf16.mxu0 0
        %545 = vmatpush1.bf16.msra.mxu0 0
        %546 = vmatprep.subr.bf16.mxu0 0
        %547 = vmatpush1.bf16.msra.mxu0 0
        %548 = vmatprep.subr.bf16.mxu0 0
        %549 = vmatpush1.bf16.msra.mxu0 0
        %550 = vmatprep.subr.bf16.mxu0 0
        %551 = vmatpush1.bf16.msra.mxu0 0
        %552 = vmatprep.subr.bf16.mxu0 0
        %553 = vmatpush1.bf16.msra.mxu0 0
        %554 = vmatprep.subr.bf16.mxu0 0
        %555 = vmatpush1.bf16.msra.mxu0 0
        %556 = vmatprep.subr.bf16.mxu0 0
        %557 = vmatpush1.bf16.msra.mxu0 0
        %558 = vmatprep.subr.bf16.mxu0 0
        %559 = vmatpush1.bf16.msra.mxu0 0
        %560 = vmatprep.subr.bf16.mxu0 0
        %561 = vmatpush1.bf16.msra.mxu0 0
        %562 = vmatprep.subr.bf16.mxu0 0
        %563 = vmatpush1.bf16.msra.mxu0 0
        %564 = vmatprep.subr.bf16.mxu0 0
        %565 = vmatpush1.bf16.msra.mxu0 0
        %566 = vmatprep.subr.bf16.mxu0 0
        %567 = vmatpush1.bf16.msra.mxu0 0
        %568 = vmatprep.subr.bf16.mxu0 0
        %569 = vmatpush1.bf16.msra.mxu0 0
        %570 = vmatprep.mubr.bf16.mxu0 0
        %571 = vmatmul.mubr.bf16.gmra.mrb[0].mxu0 %v536
        %v572 = vpop.f32.mrb[0].mxu0
        %v573 = vadd.f32 0.0, %v572
        %v574 = vpop.f32.mrb[0].mxu0
        %v575 = vpop.f32.mrb[0].mxu0
        %v576 = vpop.f32.mrb[0].mxu0
        %577 = vdwg.mxu0
        %v578 = vpack.c.bf16 %v573, %v573
        %v579 = vld [vmem:[%s3] sm:$0xf]
        %v580 = vld [vmem:[%s3 + $0x4] sm:$0xf]
        %v581 = vld [vmem:[%s3 + $0x8] sm:$0xf]
        %v582 = vld [vmem:[%s3 + $0xc] sm:$0xf]
        %v583 = vld [vmem:[%s4] sm:$0x1]
        %v588 = vunpack.c.l.b16 %v579
        %v589 = vunpack.c.l.b16 %v580
        %v590 = vunpack.c.l.b16 %v581
        %v591 = vunpack.c.l.b16 %v582
        %v592 = vpack.c.b16 %v589, %v588
        %v593 = vpack.c.b16 %v591, %v590
        %v597 = vsel %vm482, %v578, 0
        %599 = vmatprep.subr.bf16.mxu0 0
        %600 = vmatpush1.bf16.msra.mxu0 %v592
        %601 = vmatprep.subr.bf16.mxu0 0
        %602 = vmatpush1.bf16.msra.mxu0 %v593
        %603 = vmatprep.subr.bf16.mxu0 0
        %604 = vmatpush1.bf16.msra.mxu0 0
        %605 = vmatprep.subr.bf16.mxu0 0
        %606 = vmatpush1.bf16.msra.mxu0 0
        %607 = vmatprep.subr.bf16.mxu0 0
        %608 = vmatpush1.bf16.msra.mxu0 0
        %609 = vmatprep.subr.bf16.mxu0 0
        %610 = vmatpush1.bf16.msra.mxu0 0
        %611 = vmatprep.subr.bf16.mxu0 0
        %612 = vmatpush1.bf16.msra.mxu0 0
        %613 = vmatprep.subr.bf16.mxu0 0
        %614 = vmatpush1.bf16.msra.mxu0 0
        %615 = vmatprep.subr.bf16.mxu0 0
        %616 = vmatpush1.bf16.msra.mxu0 0
        %617 = vmatprep.subr.bf16.mxu0 0
        %618 = vmatpush1.bf16.msra.mxu0 0
        %619 = vmatprep.subr.bf16.mxu0 0
        %620 = vmatpush1.bf16.msra.mxu0 0
        %621 = vmatprep.subr.bf16.mxu0 0
        %622 = vmatpush1.bf16.msra.mxu0 0
        %623 = vmatprep.subr.bf16.mxu0 0
        %624 = vmatpush1.bf16.msra.mxu0 0
        %625 = vmatprep.subr.bf16.mxu0 0
        %626 = vmatpush1.bf16.msra.mxu0 0
        %627 = vmatprep.subr.bf16.mxu0 0
        %628 = vmatpush1.bf16.msra.mxu0 0
        %629 = vmatprep.subr.bf16.mxu0 0
        %630 = vmatpush1.bf16.msra.mxu0 0
        %631 = vmatprep.mubr.bf16.mxu0 0
        %632 = vmatmul.mubr.bf16.gmra.mrb[0].mxu0 %v597
        %v633 = vpop.f32.mrb[0].mxu0
        %v634 = vadd.f32 %v583, %v633
        %v635 = vpop.f32.mrb[0].mxu0
        %v636 = vpop.f32.mrb[0].mxu0
        %v637 = vpop.f32.mrb[0].mxu0
        %638 = vdwg.mxu0
        %v639 = vld [vmem:[%s477] sm:$0xff]
        %v640 = vlaneseq
        %v641 = vshrl.u32 %v640, 7
        %v642 = vsub.s32 0, %v641
        %v643 = vrot.slane %v634, %v642
        %v644 = vadd.f32 %v639, %v643
        %v645 = vld [vmem:[%s7] sm:$0x1]
        %v646 = vld [vmem:[%s8] sm:$0x1]
        %v647 = vsel %vm482, %v644, 0.0
        %648 = vadd.xlane.f32.xlu0 %v647
        %v649 = vpop.xlane.xlu0 %648
        %v650 = vmul.f32 %v649, %v486
        %v651 = vsub.f32 %v644, %v650
        %v652 = vmul.f32 %v651, %v651
        %v653 = vsel %vm482, %v652, 0.0
        %654 = vadd.xlane.f32.xlu0 %v653
        %v655 = vpop.xlane.xlu0 %654
        %v656 = vmul.f32 %v655, %v486
        %v657 = vadd.f32 %v656, 1e-05
        %v658 = vrsqrt.pop %v657
        %v659 = vmul.f32 %v651, %v658
        %v661 = vlaneseq
        %v662 = vshrl.u32 %v661, 7
        %v663 = vsub.s32 0, %v662
        %v664 = vrot.slane %v645, %v663
        %v666 = vmul.f32 %v659, %v664
        %v668 = vlaneseq
        %v669 = vshrl.u32 %v668, 7
        %v670 = vsub.s32 0, %v669
        %v671 = vrot.slane %v646, %v670
        %v673 = vadd.f32 %v666, %v671
        %v674 = vpack.c.bf16 %v673, %v673
        %v675 = vld [vmem:[%s9] sm:$0xf]
        %v676 = vld [vmem:[%s9 + $0x4] sm:$0xf]
        %v677 = vld [vmem:[%s9 + $0x8] sm:$0xf]
        %v678 = vld [vmem:[%s9 + $0xc] sm:$0xf]
        %v679 = vld [vmem:[%s10] sm:$0x1]
        %v681 = vlaneseq
        %v682 = vshrl.u32 %v681, 7
        %v683 = vsub.s32 0, %v682
        %v684 = vrot.slane %v679, %v683
        %v690 = vunpack.c.l.b16 %v675
        %v691 = vunpack.c.l.b16 %v676
        %v692 = vunpack.c.l.b16 %v677
        %v693 = vunpack.c.l.b16 %v678
        %v694 = vpack.c.b16 %v691, %v690
        %v695 = vpack.c.b16 %v693, %v692
        %v699 = vsel %vm482, %v674, 0
        %701 = vmatprep.subr.bf16.mxu0 0
        %702 = vmatpush1.bf16.msra.mxu0 %v694
        %703 = vmatprep.subr.bf16.mxu0 0
        %704 = vmatpush1.bf16.msra.mxu0 %v695
        %705 = vmatprep.subr.bf16.mxu0 0
        %706 = vmatpush1.bf16.msra.mxu0 0
        %707 = vmatprep.subr.bf16.mxu0 0
        %708 = vmatpush1.bf16.msra.mxu0 0
        %709 = vmatprep.subr.bf16.mxu0 0
        %710 = vmatpush1.bf16.msra.mxu0 0
        %711 = vmatprep.subr.bf16.mxu0 0
        %712 = vmatpush1.bf16.msra.mxu0 0
        %713 = vmatprep.subr.bf16.mxu0 0
        %714 = vmatpush1.bf16.msra.mxu0 0
        %715 = vmatprep.subr.bf16.mxu0 0
        %716 = vmatpush1.bf16.msra.mxu0 0
        %717 = vmatprep.subr.bf16.mxu0 0
        %718 = vmatpush1.bf16.msra.mxu0 0
        %719 = vmatprep.subr.bf16.mxu0 0
        %720 = vmatpush1.bf16.msra.mxu0 0
        %721 = vmatprep.subr.bf16.mxu0 0
        %722 = vmatpush1.bf16.msra.mxu0 0
        %723 = vmatprep.subr.bf16.mxu0 0
        %724 = vmatpush1.bf16.msra.mxu0 0
        %725 = vmatprep.subr.bf16.mxu0 0
        %726 = vmatpush1.bf16.msra.mxu0 0
        %727 = vmatprep.subr.bf16.mxu0 0
        %728 = vmatpush1.bf16.msra.mxu0 0
        %729 = vmatprep.subr.bf16.mxu0 0
        %730 = vmatpush1.bf16.msra.mxu0 0
        %731 = vmatprep.subr.bf16.mxu0 0
        %732 = vmatpush1.bf16.msra.mxu0 0
        %733 = vmatprep.mubr.bf16.mxu0 0
        %734 = vmatmul.mubr.bf16.gmra.mrb[0].mxu0 %v699
        %v735 = vpop.f32.mrb[0].mxu0
        %v736 = vadd.f32 %v684, %v735
        %v737 = vpop.f32.mrb[0].mxu0
        %v738 = vpop.f32.mrb[0].mxu0
        %v739 = vpop.f32.mrb[0].mxu0
        %740 = vdwg.mxu0
        %v741 = vmul.f32 %v736, 0.5
        %v742 = vmul.f32 %v736, 0.70710677
        %v743 = verf.f32.pop %v742
        %v744 = vadd.f32 %v743, 1.0
        %v745 = vmul.f32 %v741, %v744
        %v746 = vpack.c.bf16 %v745, %v745
        %v747 = vld [vmem:[%s11] sm:$0xf]
        %v748 = vld [vmem:[%s11 + $0x4] sm:$0xf]
        %v749 = vld [vmem:[%s11 + $0x8] sm:$0xf]
        %v750 = vld [vmem:[%s11 + $0xc] sm:$0xf]
        %v751 = vld [vmem:[%s11 + $0x10] sm:$0xf]
        %v752 = vld [vmem:[%s11 + $0x14] sm:$0xf]
        %v753 = vld [vmem:[%s11 + $0x18] sm:$0xf]
        %v754 = vld [vmem:[%s11 + $0x1c] sm:$0xf]
        %v755 = vld [vmem:[%s11 + $0x20] sm:$0xf]
        %v756 = vld [vmem:[%s11 + $0x24] sm:$0xf]
        %v757 = vld [vmem:[%s11 + $0x28] sm:$0xf]
        %v758 = vld [vmem:[%s11 + $0x2c] sm:$0xf]
        %v759 = vld [vmem:[%s11 + $0x30] sm:$0xf]
        %v760 = vld [vmem:[%s11 + $0x34] sm:$0xf]
        %v761 = vld [vmem:[%s11 + $0x38] sm:$0xf]
        %v762 = vld [vmem:[%s11 + $0x3c] sm:$0xf]
        %v763 = vld [vmem:[%s12] sm:$0x1]
        %v765 = vlaneseq
        %v766 = vshrl.u32 %v765, 7
        %v767 = vsub.s32 0, %v766
        %v768 = vrot.slane %v763, %v767
        %v786 = vunpack.c.l.b16 %v747
        %v787 = vunpack.c.l.b16 %v748
        %v788 = vunpack.c.l.b16 %v749
        %v789 = vunpack.c.l.b16 %v750
        %v790 = vunpack.c.l.b16 %v751
        %v791 = vunpack.c.l.b16 %v752
        %v792 = vunpack.c.l.b16 %v753
        %v793 = vunpack.c.l.b16 %v754
        %v794 = vunpack.c.l.b16 %v755
        %v795 = vunpack.c.l.b16 %v756
        %v796 = vunpack.c.l.b16 %v757
        %v797 = vunpack.c.l.b16 %v758
        %v798 = vunpack.c.l.b16 %v759
        %v799 = vunpack.c.l.b16 %v760
        %v800 = vunpack.c.l.b16 %v761
        %v801 = vunpack.c.l.b16 %v762
        %v802 = vpack.c.b16 %v787, %v786
        %v803 = vpack.c.b16 %v789, %v788
        %v804 = vpack.c.b16 %v791, %v790
        %v805 = vpack.c.b16 %v793, %v792
        %v806 = vpack.c.b16 %v795, %v794
        %v807 = vpack.c.b16 %v797, %v796
        %v808 = vpack.c.b16 %v799, %v798
        %v809 = vpack.c.b16 %v801, %v800
        %818 = vmatprep.subr.bf16.mxu0 0
        %819 = vmatpush1.bf16.msra.mxu0 %v802
        %820 = vmatprep.subr.bf16.mxu0 0
        %821 = vmatpush1.bf16.msra.mxu0 %v803
        %822 = vmatprep.subr.bf16.mxu0 0
        %823 = vmatpush1.bf16.msra.mxu0 %v804
        %824 = vmatprep.subr.bf16.mxu0 0
        %825 = vmatpush1.bf16.msra.mxu0 %v805
        %826 = vmatprep.subr.bf16.mxu0 0
        %827 = vmatpush1.bf16.msra.mxu0 %v806
        %828 = vmatprep.subr.bf16.mxu0 0
        %829 = vmatpush1.bf16.msra.mxu0 %v807
        %830 = vmatprep.subr.bf16.mxu0 0
        %831 = vmatpush1.bf16.msra.mxu0 %v808
        %832 = vmatprep.subr.bf16.mxu0 0
        %833 = vmatpush1.bf16.msra.mxu0 %v809
        %834 = vmatprep.subr.bf16.mxu0 0
        %835 = vmatpush1.bf16.msra.mxu0 0
        %836 = vmatprep.subr.bf16.mxu0 0
        %837 = vmatpush1.bf16.msra.mxu0 0
        %838 = vmatprep.subr.bf16.mxu0 0
        %839 = vmatpush1.bf16.msra.mxu0 0
        %840 = vmatprep.subr.bf16.mxu0 0
        %841 = vmatpush1.bf16.msra.mxu0 0
        %842 = vmatprep.subr.bf16.mxu0 0
        %843 = vmatpush1.bf16.msra.mxu0 0
        %844 = vmatprep.subr.bf16.mxu0 0
        %845 = vmatpush1.bf16.msra.mxu0 0
        %846 = vmatprep.subr.bf16.mxu0 0
        %847 = vmatpush1.bf16.msra.mxu0 0
        %848 = vmatprep.subr.bf16.mxu0 0
        %849 = vmatpush1.bf16.msra.mxu0 0
        %850 = vmatprep.mubr.bf16.mxu0 0
        %851 = vmatmul.mubr.bf16.gmra.mrb[0].mxu0 %v746
        %v852 = vpop.f32.mrb[0].mxu0
        %v853 = vadd.f32 %v768, %v852
        %v854 = vpop.f32.mrb[0].mxu0
        %v855 = vpop.f32.mrb[0].mxu0
        %v856 = vpop.f32.mrb[0].mxu0
        %857 = vdwg.mxu0
        %v858 = vadd.f32 %v644, %v853
        %859 = vst.msk [vmem:[%s466] sm:$0xff] %vm482, %v858
        %s860 = sand.u32 %s334, 1
        %s861 = scalar_lea.sflag [#allocation3], %s860
        %s862 = sand.u32 %s334, 1
        %s863 = smul.addr %s862, 8
        %s864 = scalar_lea.vmem [#allocation2], %s863
        // Predicated region
        $region73: #{tpu_custom_call.1} parent=71 // pred_check
          %p865 = pneg %p344
        $region74: #{tpu_custom_call.1} parent=71 // pred_check_branch
          %867 = sbr.rel (%p865) target = $region76
        $region75: #{tpu_custom_call.1} parent=71 // pred_region
          %s869 = ssub.s32 128, 128
          %870 = vsyncadd %s861, %s869
          %s871 = sadd.s32 %s32, %s31
          %s872 = smul.addr %s871, 128
          %s873 = scalar_lea.hbm %s13, %s872
          %s875 = sshll.u32 %s864, 4
          %s876 = int_to_ptr.vmem [resolvable:$true] %s875
          %878 = dma.vmem_to_hbm [thread:$0]  %s876, 128, %s873, %s861
        $region76: #{tpu_custom_call.1} parent=71 // pred_fallthru
          _
      $region72: #{tpu_custom_call.1} parent=5 // pred_fallthru
        _
      %p879 = scmp.le.s32.totalorder 2, %s22
      // Predicated region
      $region77: #{tpu_custom_call.1} parent=5 // pred_check
        %p880 = pneg %p879
      $region78: #{tpu_custom_call.1} parent=5 // pred_check_branch
        %882 = sbr.rel (%p880) target = $region80
      $region79: #{tpu_custom_call.1} parent=5 // pred_region
        %s883 = ssub.s32 %s22, 2
        // Predicated region
        $region81: #{tpu_custom_call.1} parent=79 // pred_check
          %p884 = pneg %p350
        $region82: #{tpu_custom_call.1} parent=79 // pred_check_branch
          %886 = sbr.rel (%p884) target = $region84
        $region83: #{tpu_custom_call.1} parent=79 // pred_region
          %s887 = sand.u32 %s335, 1
          %s888 = scalar_lea.sflag [#allocation3], %s887
          %s889 = sand.u32 %s335, 1
          %s890 = smul.addr %s889, 8
          %s891 = scalar_lea.vmem [#allocation2], %s890
          %892 = dma.done %s888, 128
        $region84: #{tpu_custom_call.1} parent=79 // pred_fallthru
          _
      $region80: #{tpu_custom_call.1} parent=5 // pred_fallthru
        _
    $region6: #{tpu_custom_call.1} parent=1 // loop_footer
      %s26 = sadd.s32 1, %s22
    $region7: #{tpu_custom_call.1} parent=1 // loop_footer_branch
      %21 = sbr.rel target = $region3
    $region8: #{tpu_custom_call.1} parent=1 // loop_exit
      _
    %893 = vsyncpa [#allocation3], 1
    %s894 = scalar_lea.sflag [#allocation3], 1
    %895 = vsyncpa %s894, 1

</llo_original>
